<compile_context>
chip_gen: v6e
topology: v6e:2x2x1
jax: 0.10.0
libtpu: 0.0.40
codegen_flags: <defaults>
</compile_context>

<pallas_src>
import jax
import jax.numpy as jnp
from jax import lax
from jax.experimental import pallas as pl
from jax.experimental.pallas import tpu as pltpu

# Module hyper-parameters (from DySepConvAtten.__init__)
HIDDEN_DIM = 256          # C
NUM_PROPOSALS = 64        # N
KERNEL_SIZE = 3           # K
NK = NUM_PROPOSALS + KERNEL_SIZE   # 67, weight_linear output width
PADDED_OUT = 128          # weight-linear output padded to a full lane width
LN_EPS = 1e-5


def dysepconv_kernel(q_ref, v_ref, w_ref, b_ref, gamma_ref, beta_ref,
                     m1_ref, p1_ref, o_ref):
    rows = q_ref.shape[0]            # block_b * N
    N = NUM_PROPOSALS
    C = HIDDEN_DIM
    BB = rows // N

    # ---- dynamic conv weights: Linear(C -> N + K), columns reordered so that
    #      [0:N] = pointwise matrix, [N:N+3] = depthwise taps, rest = zero pad.
    dyw = jnp.dot(q_ref[...], w_ref[...],
                  preferred_element_type=jnp.float32)          # (rows, 128) f32
    dyw = dyw + b_ref[...]

    w0 = dyw[:, N + 0:N + 1]                                   # tap for v[:, j-1]
    w1 = dyw[:, N + 1:N + 2]                                   # tap for v[:, j]
    w2 = dyw[:, N + 2:N + 3]                                   # tap for v[:, j+1]

    # ---- depthwise conv1d (groups=N, padding='same', kernel=3), f32 math.
    v = v_ref[...].astype(jnp.float32)                          # (rows, C)
    v_m1 = pltpu.roll(v, shift=1, axis=1) * m1_ref[...]         # v[:, j-1], col 0 zeroed
    v_p1 = pltpu.roll(v, shift=C - 1, axis=1) * p1_ref[...]     # v[:, j+1], col C-1 zeroed
    depth = jnp.maximum(w0 * v_m1 + w1 * v + w2 * v_p1, 0.0)    # ReLU

    # ---- pointwise conv1d (kernel=1) == per-batch (N, N) @ (N, C) matmul.
    point_w = dyw[:, :N].reshape(BB, N, N).astype(jnp.bfloat16)
    depth_b = depth.reshape(BB, N, C).astype(jnp.bfloat16)
    point = jnp.einsum('bmn,bnc->bmc', point_w, depth_b,
                       preferred_element_type=jnp.float32)      # (BB, N, C) f32
    point = point.reshape(rows, C)

    # ---- LayerNorm over hidden dim C (f32).
    mean = jnp.mean(point, axis=-1, keepdims=True)
    xc = point - mean
    var = jnp.mean(xc * xc, axis=-1, keepdims=True)
    inv = lax.rsqrt(var + LN_EPS)
    o_ref[...] = (xc * inv * gamma_ref[...] + beta_ref[...]).astype(o_ref.dtype)


def dysepconv_atten(query, value, w_lin, b_lin, gamma, beta, *, block_b=None):
    """query, value: (B, N, C).  w_lin: (N+K, C) torch layout.  Returns (B, N, C) f32."""
    B, N, C = query.shape
    assert N == NUM_PROPOSALS and C == HIDDEN_DIM
    K = KERNEL_SIZE

    # Batch elements per grid step: amortize per-step overhead, but keep the
    # grid length >= 2 when possible so both v7x TensorCores stay busy.
    if block_b is None:
        block_b = 1
        for cand in (16, 8, 4, 2):
            if B % cand == 0 and B // cand >= 2:
                block_b = cand
                break
    assert B % block_b == 0, "block_b must divide B"
    grid_b = B // block_b
    rows = block_b * N

    # Reorder weight-linear output columns (pointwise first, then the 3
    # depthwise taps) and zero-pad to 128 lanes -> lane-dense matmul output.
    w = jnp.asarray(w_lin, jnp.float32)                         # (N+K, C)
    b = jnp.asarray(b_lin, jnp.float32)                         # (N+K,)
    w_reord = jnp.concatenate([w[K:], w[:K]], axis=0)           # (N+K, C)
    b_reord = jnp.concatenate([b[K:], b[:K]], axis=0)           # (N+K,)
    w_pad = jnp.zeros((PADDED_OUT, C), jnp.float32).at[:NK].set(w_reord)
    b_pad = jnp.zeros((PADDED_OUT,), jnp.float32).at[:NK].set(b_reord)
    wlin_t = w_pad.T.astype(jnp.bfloat16)                       # (C, 128) bf16
    blin = b_pad.reshape(1, PADDED_OUT)                         # (1, 128) f32

    gamma2 = jnp.asarray(gamma, jnp.float32).reshape(1, C)
    beta2 = jnp.asarray(beta, jnp.float32).reshape(1, C)

    # Boundary masks for the 'same' padding (host-side constants).
    lane = jnp.arange(C)
    mask_m1 = (lane >= 1).astype(jnp.float32).reshape(1, C)
    mask_p1 = (lane < C - 1).astype(jnp.float32).reshape(1, C)

    # Lane-/sublane-dense 2-D slabs for the kernel.
    q2 = query.reshape(B * N, C).astype(jnp.bfloat16)
    v2 = value.reshape(B * N, C).astype(jnp.bfloat16)

    out2 = pl.pallas_call(
        dysepconv_kernel,
        out_shape=jax.ShapeDtypeStruct((B * N, C), jnp.float32),
        grid=(grid_b,),
        in_specs=[
            pl.BlockSpec((rows, C), lambda g: (g, 0)),           # query (bf16)
            pl.BlockSpec((rows, C), lambda g: (g, 0)),           # value (bf16)
            pl.BlockSpec((C, PADDED_OUT), lambda g: (0, 0)),     # W_lin^T (padded, bf16)
            pl.BlockSpec((1, PADDED_OUT), lambda g: (0, 0)),     # b_lin (padded)
            pl.BlockSpec((1, C), lambda g: (0, 0)),              # LN gamma
            pl.BlockSpec((1, C), lambda g: (0, 0)),              # LN beta
            pl.BlockSpec((1, C), lambda g: (0, 0)),              # mask for v[:, j-1]
            pl.BlockSpec((1, C), lambda g: (0, 0)),              # mask for v[:, j+1]
        ],
        out_specs=pl.BlockSpec((rows, C), lambda g: (g, 0)),
        compiler_params=pltpu.CompilerParams(
            dimension_semantics=("parallel",),
            vmem_limit_bytes=48 * 1024 * 1024),
    )(q2, v2, wlin_t, blin, gamma2, beta2, mask_m1, mask_p1)

    return out2.reshape(B, N, C)


def reference_forward(query, value, w_lin, b_lin, gamma, beta):
    """Pure-JAX mirror of the PyTorch forward with the same bf16-matmul /
    f32-accumulate dtype policy as the kernel, for validation."""
    B, N, C = query.shape
    K = KERNEL_SIZE
    qb = query.astype(jnp.bfloat16)
    vb = value.astype(jnp.bfloat16).astype(jnp.float32)
    wb = jnp.asarray(w_lin, jnp.float32).astype(jnp.bfloat16)

    dyw = jnp.einsum('bnc,oc->bno', qb, wb,
                     preferred_element_type=jnp.float32)
    dyw = dyw + jnp.asarray(b_lin, jnp.float32)                  # (B, N, N+K)
    dw = dyw[:, :, :K]                                           # (B, N, 3)
    pw = dyw[:, :, K:]                                           # (B, N, N)

    vpad = jnp.pad(vb, ((0, 0), (0, 0), (1, 1)))
    depth = (dw[:, :, 0:1] * vpad[:, :, 0:C]
             + dw[:, :, 1:2] * vpad[:, :, 1:C + 1]
             + dw[:, :, 2:3] * vpad[:, :, 2:C + 2])
    depth = jnp.maximum(depth, 0.0)

    point = jnp.einsum('bmn,bnc->bmc', pw.astype(jnp.bfloat16),
                       depth.astype(jnp.bfloat16),
                       preferred_element_type=jnp.float32)
    mean = point.mean(-1, keepdims=True)
    var = ((point - mean) ** 2).mean(-1, keepdims=True)
    return ((point - mean) / jnp.sqrt(var + LN_EPS)
            * gamma.reshape(1, 1, C) + beta.reshape(1, 1, C))


if __name__ == "__main__":
    key = jax.random.PRNGKey(0)
    kq, kv, kw = jax.random.split(key, 3)

    B = 2
    query = jax.random.normal(kq, (B, NUM_PROPOSALS, HIDDEN_DIM), jnp.float32)
    value = jax.random.normal(kv, (B, NUM_PROPOSALS, HIDDEN_DIM), jnp.float32)

    # Deterministic parameter init mirroring _init_weights:
    #   Linear: trunc_normal(std=0.02), bias=0 ; LayerNorm: weight=1, bias=0.
    w_lin = jax.random.truncated_normal(kw, -2.0, 2.0,
                                        (NK, HIDDEN_DIM), jnp.float32) * 0.02
    b_lin = jnp.zeros((NK,), jnp.float32)
    gamma = jnp.ones((HIDDEN_DIM,), jnp.float32)
    beta = jnp.zeros((HIDDEN_DIM,), jnp.float32)

    out = dysepconv_atten(query, value, w_lin, b_lin, gamma, beta)
    out = jax.block_until_ready(out)

    ref = reference_forward(query, value, w_lin, b_lin, gamma, beta)
    assert out.shape == (B, NUM_PROPOSALS, HIDDEN_DIM)
    assert jnp.allclose(out, ref, atol=1e-2, rtol=1e-2), (
        float(jnp.max(jnp.abs(out - ref))))

    print("KERNEL_OK")
</pallas_src>

<mosaic_0001>
module attributes {stable_mosaic.version = 11 : i64} {
  func.func @dysepconv_kernel(%arg0: i32, %arg1: memref<64x256xbf16, #tpu.memory_space<vmem>>, %arg2: memref<64x256xbf16, #tpu.memory_space<vmem>>, %arg3: memref<256x128xbf16, #tpu.memory_space<vmem>>, %arg4: memref<1x128xf32, #tpu.memory_space<vmem>>, %arg5: memref<1x256xf32, #tpu.memory_space<vmem>>, %arg6: memref<1x256xf32, #tpu.memory_space<vmem>>, %arg7: memref<1x256xf32, #tpu.memory_space<vmem>>, %arg8: memref<1x256xf32, #tpu.memory_space<vmem>>, %arg9: memref<64x256xf32, #tpu.memory_space<vmem>>) attributes {dimension_semantics = [#tpu.dimension_semantics<parallel>], iteration_bounds = array<i64: 2>, scalar_prefetch = 0 : i64, scratch_operands = 0 : i64, tpu.core_type = #tpu.core_type<tc>, window_params = [{transform_indices = @transform_0, window_bounds = array<i64: 64, 256>}, {transform_indices = @transform_1, window_bounds = array<i64: 64, 256>}, {pipeline_mode = #tpu.pipeline_mode<synchronous>, transform_indices = @transform_2, window_bounds = array<i64: 256, 128>}, {pipeline_mode = #tpu.pipeline_mode<synchronous>, transform_indices = @transform_3, window_bounds = array<i64: 1, 128>}, {pipeline_mode = #tpu.pipeline_mode<synchronous>, transform_indices = @transform_4, window_bounds = array<i64: 1, 256>}, {pipeline_mode = #tpu.pipeline_mode<synchronous>, transform_indices = @transform_5, window_bounds = array<i64: 1, 256>}, {pipeline_mode = #tpu.pipeline_mode<synchronous>, transform_indices = @transform_6, window_bounds = array<i64: 1, 256>}, {pipeline_mode = #tpu.pipeline_mode<synchronous>, transform_indices = @transform_7, window_bounds = array<i64: 1, 256>}, {transform_indices = @transform_8, window_bounds = array<i64: 64, 256>}]} {
    %c0 = arith.constant 0 : index
    %c0_0 = arith.constant 0 : index
    %0 = vector.load %arg1[%c0, %c0_0] : memref<64x256xbf16, #tpu.memory_space<vmem>>, vector<64x256xbf16>
    %c0_1 = arith.constant 0 : index
    %c0_2 = arith.constant 0 : index
    %1 = vector.load %arg3[%c0_1, %c0_2] : memref<256x128xbf16, #tpu.memory_space<vmem>>, vector<256x128xbf16>
    %cst = arith.constant dense<0.000000e+00> : vector<64x128xf32>
    %2 = tpu.matmul %0, %1, %cst {dimension_numbers = #tpu.dot_dimension_numbers<[1], [0], [0], [1], [0, 0, 1, 1], [], []>} : vector<64x256xbf16>, vector<256x128xbf16>, vector<64x128xf32> -> vector<64x128xf32>
    %c0_3 = arith.constant 0 : index
    %c0_4 = arith.constant 0 : index
    %3 = vector.load %arg4[%c0_3, %c0_4] : memref<1x128xf32, #tpu.memory_space<vmem>>, vector<1x128xf32>
    %4 = vector.broadcast %3 : vector<1x128xf32> to vector<64x128xf32>
    %5 = arith.addf %2, %4 : vector<64x128xf32>
    %6 = vector.extract_strided_slice %5 {offsets = [0, 64], sizes = [64, 1], strides = [1, 1]} : vector<64x128xf32> to vector<64x1xf32>
    %7 = vector.extract_strided_slice %5 {offsets = [0, 65], sizes = [64, 1], strides = [1, 1]} : vector<64x128xf32> to vector<64x1xf32>
    %8 = vector.extract_strided_slice %5 {offsets = [0, 66], sizes = [64, 1], strides = [1, 1]} : vector<64x128xf32> to vector<64x1xf32>
    %c0_5 = arith.constant 0 : index
    %c0_6 = arith.constant 0 : index
    %9 = vector.load %arg2[%c0_5, %c0_6] : memref<64x256xbf16, #tpu.memory_space<vmem>>, vector<64x256xbf16>
    %10 = arith.extf %9 : vector<64x256xbf16> to vector<64x256xf32>
    %c1_i32 = arith.constant 1 : i32
    %11 = tpu.dynamic_rotate %10 by %c1_i32 dim 1 : vector<64x256xf32>, i32 -> vector<64x256xf32>
    %c0_7 = arith.constant 0 : index
    %c0_8 = arith.constant 0 : index
    %12 = vector.load %arg7[%c0_7, %c0_8] : memref<1x256xf32, #tpu.memory_space<vmem>>, vector<1x256xf32>
    %13 = vector.broadcast %12 : vector<1x256xf32> to vector<64x256xf32>
    %14 = arith.mulf %11, %13 : vector<64x256xf32>
    %c255_i32 = arith.constant 255 : i32
    %15 = tpu.dynamic_rotate %10 by %c255_i32 dim 1 : vector<64x256xf32>, i32 -> vector<64x256xf32>
    %c0_9 = arith.constant 0 : index
    %c0_10 = arith.constant 0 : index
    %16 = vector.load %arg8[%c0_9, %c0_10] : memref<1x256xf32, #tpu.memory_space<vmem>>, vector<1x256xf32>
    %17 = vector.broadcast %16 : vector<1x256xf32> to vector<64x256xf32>
    %18 = arith.mulf %15, %17 : vector<64x256xf32>
    %19 = vector.broadcast %6 : vector<64x1xf32> to vector<64x256xf32>
    %20 = arith.mulf %19, %14 : vector<64x256xf32>
    %21 = vector.broadcast %7 : vector<64x1xf32> to vector<64x256xf32>
    %22 = arith.mulf %21, %10 : vector<64x256xf32>
    %23 = arith.addf %20, %22 : vector<64x256xf32>
    %24 = vector.broadcast %8 : vector<64x1xf32> to vector<64x256xf32>
    %25 = arith.mulf %24, %18 : vector<64x256xf32>
    %26 = arith.addf %23, %25 : vector<64x256xf32>
    %cst_11 = arith.constant 0.000000e+00 : f32
    %27 = vector.broadcast %cst_11 : f32 to vector<64x256xf32>
    %28 = arith.maximumf %26, %27 : vector<64x256xf32>
    %29 = vector.extract_strided_slice %5 {offsets = [0, 0], sizes = [64, 64], strides = [1, 1]} : vector<64x128xf32> to vector<64x64xf32>
    %30 = vector.shape_cast %29 : vector<64x64xf32> to vector<1x64x64xf32>
    %31 = arith.truncf %30 : vector<1x64x64xf32> to vector<1x64x64xbf16>
    %32 = vector.shape_cast %28 : vector<64x256xf32> to vector<1x64x256xf32>
    %33 = arith.truncf %32 : vector<1x64x256xf32> to vector<1x64x256xbf16>
    "tpu.trace_start"() <{level = 10 : i32, message = "bmn,bnc->bmc"}> : () -> ()
    %cst_12 = arith.constant dense<0.000000e+00> : vector<1x64x256xf32>
    %34 = tpu.matmul %31, %33, %cst_12 {dimension_numbers = #tpu.dot_dimension_numbers<[2], [1], [1], [2], [0, 0, 0, 1, 1, 2], [0], [0]>} : vector<1x64x64xbf16>, vector<1x64x256xbf16>, vector<1x64x256xf32> -> vector<1x64x256xf32>
    "tpu.trace_stop"() : () -> ()
    %35 = vector.shape_cast %34 : vector<1x64x256xf32> to vector<64x256xf32>
    %cst_13 = arith.constant dense<0.000000e+00> : vector<64xf32>
    %36 = vector.multi_reduction <add>, %35, %cst_13 [1] : vector<64x256xf32> to vector<64xf32>
    %37 = vector.shape_cast %36 : vector<64xf32> to vector<64x1xf32>
    %cst_14 = arith.constant 2.560000e+02 : f32
    %38 = vector.broadcast %cst_14 : f32 to vector<64x1xf32>
    %39 = arith.divf %37, %38 : vector<64x1xf32>
    %40 = vector.broadcast %39 : vector<64x1xf32> to vector<64x256xf32>
    %41 = arith.subf %35, %40 : vector<64x256xf32>
    %42 = arith.mulf %41, %41 : vector<64x256xf32>
    %cst_15 = arith.constant dense<0.000000e+00> : vector<64xf32>
    %43 = vector.multi_reduction <add>, %42, %cst_15 [1] : vector<64x256xf32> to vector<64xf32>
    %44 = vector.shape_cast %43 : vector<64xf32> to vector<64x1xf32>
    %cst_16 = arith.constant 2.560000e+02 : f32
    %45 = vector.broadcast %cst_16 : f32 to vector<64x1xf32>
    %46 = arith.divf %44, %45 : vector<64x1xf32>
    %cst_17 = arith.constant 9.99999974E-6 : f32
    %47 = vector.broadcast %cst_17 : f32 to vector<64x1xf32>
    %48 = arith.addf %46, %47 : vector<64x1xf32>
    %49 = math.rsqrt %48 : vector<64x1xf32>
    %50 = vector.broadcast %49 : vector<64x1xf32> to vector<64x256xf32>
    %51 = arith.mulf %41, %50 : vector<64x256xf32>
    %c0_18 = arith.constant 0 : index
    %c0_19 = arith.constant 0 : index
    %52 = vector.load %arg5[%c0_18, %c0_19] : memref<1x256xf32, #tpu.memory_space<vmem>>, vector<1x256xf32>
    %53 = vector.broadcast %52 : vector<1x256xf32> to vector<64x256xf32>
    %54 = arith.mulf %51, %53 : vector<64x256xf32>
    %c0_20 = arith.constant 0 : index
    %c0_21 = arith.constant 0 : index
    %55 = vector.load %arg6[%c0_20, %c0_21] : memref<1x256xf32, #tpu.memory_space<vmem>>, vector<1x256xf32>
    %56 = vector.broadcast %55 : vector<1x256xf32> to vector<64x256xf32>
    %57 = arith.addf %54, %56 : vector<64x256xf32>
    %c0_22 = arith.constant 0 : index
    %c0_23 = arith.constant 0 : index
    %58 = vector.load %arg9[%c0_22, %c0_23] : memref<64x256xf32, #tpu.memory_space<vmem>>, vector<64x256xf32>
    tpu.vector_store %arg9[%c0_22, %c0_23], %57 {strides = array<i32>} : memref<64x256xf32, #tpu.memory_space<vmem>>, vector<64x256xf32>,
    return
  }
  func.func @transform_0(%arg0: i32) -> (i32, i32) {
    %c0_i32 = arith.constant 0 : i32
    %c0_i32_0 = arith.constant 0 : i32
    return %arg0, %c0_i32 : i32, i32
  }
  func.func @transform_1(%arg0: i32) -> (i32, i32) {
    %c0_i32 = arith.constant 0 : i32
    %c0_i32_0 = arith.constant 0 : i32
    return %arg0, %c0_i32 : i32, i32
  }
  func.func @transform_2(%arg0: i32) -> (i32, i32) {
    %c0_i32 = arith.constant 0 : i32
    %c0_i32_0 = arith.constant 0 : i32
    %c0_i32_1 = arith.constant 0 : i32
    return %c0_i32, %c0_i32_0 : i32, i32
  }
  func.func @transform_3(%arg0: i32) -> (i32, i32) {
    %c0_i32 = arith.constant 0 : i32
    %c0_i32_0 = arith.constant 0 : i32
    %c0_i32_1 = arith.constant 0 : i32
    return %c0_i32, %c0_i32_0 : i32, i32
  }
  func.func @transform_4(%arg0: i32) -> (i32, i32) {
    %c0_i32 = arith.constant 0 : i32
    %c0_i32_0 = arith.constant 0 : i32
    %c0_i32_1 = arith.constant 0 : i32
    return %c0_i32, %c0_i32_0 : i32, i32
  }
  func.func @transform_5(%arg0: i32) -> (i32, i32) {
    %c0_i32 = arith.constant 0 : i32
    %c0_i32_0 = arith.constant 0 : i32
    %c0_i32_1 = arith.constant 0 : i32
    return %c0_i32, %c0_i32_0 : i32, i32
  }
  func.func @transform_6(%arg0: i32) -> (i32, i32) {
    %c0_i32 = arith.constant 0 : i32
    %c0_i32_0 = arith.constant 0 : i32
    %c0_i32_1 = arith.constant 0 : i32
    return %c0_i32, %c0_i32_0 : i32, i32
  }
  func.func @transform_7(%arg0: i32) -> (i32, i32) {
    %c0_i32 = arith.constant 0 : i32
    %c0_i32_0 = arith.constant 0 : i32
    %c0_i32_1 = arith.constant 0 : i32
    return %c0_i32, %c0_i32_0 : i32, i32
  }
  func.func @transform_8(%arg0: i32) -> (i32, i32) {
    %c0_i32 = arith.constant 0 : i32
    %c0_i32_0 = arith.constant 0 : i32
    return %arg0, %c0_i32 : i32, i32
  }
}

</mosaic_0001>

<llo_original>
// kernel: tpu_custom_call.1
$region0: #{tpu_custom_call.1}
  #allocation0 [shape = 'u32[]', space=smem, size = 0x4, offset = 0x4, fixed_abs, tag = 'smem constant byte address 0x4 - core index']
  #allocation1 [shape = 'u32[144,128]{1,0:T(1,128)}', space=vmem, size = 0x12000, scoped, tag = 'internal scratch']
  %s0 = inlined_call_operand.hbm [shape: bf16[128,256], index: 0, kind: input, shape index: {}]
  %s1 = inlined_call_operand.hbm [shape: bf16[128,256], index: 1, kind: input, shape index: {}]
  %s2 = inlined_call_operand.hbm [shape: bf16[256,128], index: 2, kind: input, shape index: {}]
  %s3 = inlined_call_operand.vmem [shape: f32[1,128], index: 3, kind: input, shape index: {}]
  %s4 = inlined_call_operand.vmem [shape: f32[1,256], index: 4, kind: input, shape index: {}]
  %s5 = inlined_call_operand.vmem [shape: f32[1,256], index: 5, kind: input, shape index: {}]
  %s6 = inlined_call_operand.vmem [shape: f32[1,256], index: 6, kind: input, shape index: {}]
  %s7 = inlined_call_operand.vmem [shape: f32[1,256], index: 7, kind: input, shape index: {}]
  %s8 = inlined_call_operand.hbm [shape: f32[128,256], index: 8, kind: output, shape index: {}]
  %s9 = sld [smem:[#allocation0]]
  $region77: #{tpu_custom_call.1} parent=0
    _
  %s11 = ssub.s32 1, %s9
  %s12 = scalar_select 0, %s11, %s9
  $region1: #{tpu_custom_call.1} parent=0
    #allocation2 [shape = 'u8[65536]{0}', space=vmem, size = 0x10000, scoped, tag = 'input window, operand 0']
    #allocation3 [shape = 's32[2]{0}', space=sflag, size = 0x8, scoped, tag = 'scoped memory for tpu_custom_call.1']
    #allocation4 [shape = 's32[2]{0}', space=sflag, size = 0x8, scoped, tag = 'scoped memory for tpu_custom_call.1']
    #allocation5 [shape = 'u8[65536]{0}', space=vmem, size = 0x10000, scoped, tag = 'input window, operand 1']
    #allocation6 [shape = 's32[2]{0}', space=sflag, size = 0x8, scoped, tag = 'scoped memory for tpu_custom_call.1']
    #allocation7 [shape = 'u8[65536]{0}', space=vmem, size = 0x10000, scoped, tag = 'input window, operand 2, single buffered']
    #allocation8 [shape = 'u8[131072]{0}', space=vmem, size = 0x20000, scoped, tag = 'output window, operand 0']
    %13 = vsyncpa [#allocation3], 0
    %s14 = scalar_lea.sflag [#allocation3], 1
    %15 = vsyncpa %s14, 0
    %16 = vsyncpa [#allocation6], 0
    %s17 = scalar_lea.sflag [#allocation6], 1
    %18 = vsyncpa %s17, 0
    %19 = vsyncpa [#allocation4], 0
    %s20 = scalar_lea.sflag [#allocation4], 1
    %21 = vsyncpa %s20, 0
    loop: start=0, step=1, limit=4
    $region2: #{tpu_custom_call.1} parent=1 // loop_pre_header
      _
    $region3: #{tpu_custom_call.1} parent=1 // loop_header
      %s23 = sphi 0, %s27
      %p24 = scmp.ge.s32.totalorder %s23, 4
      %s33 = sphi 0, %s35
      %s36 = sphi 0, %s33
      %s37 = sphi 0, %s36
      %s53 = sphi 0, %s37
      %s59 = sphi 0, %s61
      %s62 = sphi 0, %s59
      %s63 = sphi 0, %s62
      %s79 = sphi 0, %s63
      %s83 = sphi 0, %s83
      %s85 = sphi 0, %s83
      %s86 = sphi 0, %s85
      %s100 = sphi 0, %s86
      %s104 = sphi 0, %s104
      %s106 = sphi 0, %s104
      %s107 = sphi 0, %s106
      %s121 = sphi 0, %s107
      %s125 = sphi 0, %s125
      %s127 = sphi 0, %s125
      %s128 = sphi 0, %s127
      %s142 = sphi 0, %s128
      %s146 = sphi 0, %s146
      %s148 = sphi 0, %s146
      %s149 = sphi 0, %s148
      %s163 = sphi 0, %s149
      %s167 = sphi 0, %s167
      %s169 = sphi 0, %s167
      %s170 = sphi 0, %s169
      %s184 = sphi 0, %s170
      %s188 = sphi 0, %s188
      %s190 = sphi 0, %s188
      %s191 = sphi 0, %s190
      %s205 = sphi 0, %s191
      %s211 = sphi 0, %s213
      %s214 = sphi 0, %s211
      %s215 = sphi 0, %s214
      %s231 = sphi 0, %s215
    $region4: #{tpu_custom_call.1} parent=1 // loop_header_branch
      %26 = sbr.rel (%p24) target = $region8
    $region5: #{tpu_custom_call.1} parent=1 // loop_body
      %s28 = ssub.s32 %s23, 1
      %s29 = ssub.s32 %s23, 2
      %s30 = sadd.s32 %s23, 1
      %s31 = ssub.s32 %s23, %s30
      %p32 = scmp.eq.s32.totalorder %s31, 0
      %s34 = sadd.s32 %s33, 1
      %s35 = scalar_select %p32, %s33, %s34
      %p38 = pneg %p32
      %p39 = scmp.eq.s32.totalorder %s23, 1
      %p40 = por %p38, %p39
      %p41 = scmp.ne.s32.totalorder %s33, %s36
      %p42 = scmp.eq.s32.totalorder %s23, 0
      %p43 = por %p41, %p42
      %p44 = scmp.ne.s32.totalorder %s33, %s36
      %p45 = scmp.eq.s32.totalorder %s28, 1
      %p46 = por %p44, %p45
      %p47 = scmp.ne.s32.totalorder %s36, %s37
      %p48 = scmp.eq.s32.totalorder %s28, 0
      %p49 = por %p47, %p48
      %p50 = scmp.ne.s32.totalorder %s36, %s37
      %p51 = scmp.eq.s32.totalorder %s29, 1
      %p52 = por %p50, %p51
      %p54 = scmp.ne.s32.totalorder %s37, %s53
      %p55 = scmp.eq.s32.totalorder %s29, 0
      %p56 = por %p54, %p55
      %s57 = ssub.s32 %s23, %s30
      %p58 = scmp.eq.s32.totalorder %s57, 0
      %s60 = sadd.s32 %s59, 1
      %s61 = scalar_select %p58, %s59, %s60
      %p64 = pneg %p58
      %p65 = scmp.eq.s32.totalorder %s23, 1
      %p66 = por %p64, %p65
      %p67 = scmp.ne.s32.totalorder %s59, %s62
      %p68 = scmp.eq.s32.totalorder %s23, 0
      %p69 = por %p67, %p68
      %p70 = scmp.ne.s32.totalorder %s59, %s62
      %p71 = scmp.eq.s32.totalorder %s28, 1
      %p72 = por %p70, %p71
      %p73 = scmp.ne.s32.totalorder %s62, %s63
      %p74 = scmp.eq.s32.totalorder %s28, 0
      %p75 = por %p73, %p74
      %p76 = scmp.ne.s32.totalorder %s62, %s63
      %p77 = scmp.eq.s32.totalorder %s29, 1
      %p78 = por %p76, %p77
      %p80 = scmp.ne.s32.totalorder %s63, %s79
      %p81 = scmp.eq.s32.totalorder %s29, 0
      %p82 = por %p80, %p81
      %s84 = sadd.s32 %s83, 1
      %p87 = scmp.eq.s32.totalorder %s23, 1
      %p88 = scmp.ne.s32.totalorder %s83, %s85
      %p89 = scmp.eq.s32.totalorder %s23, 0
      %p90 = por %p88, %p89
      %p91 = scmp.ne.s32.totalorder %s83, %s85
      %p92 = scmp.eq.s32.totalorder %s28, 1
      %p93 = por %p91, %p92
      %p94 = scmp.ne.s32.totalorder %s85, %s86
      %p95 = scmp.eq.s32.totalorder %s28, 0
      %p96 = por %p94, %p95
      %p97 = scmp.ne.s32.totalorder %s85, %s86
      %p98 = scmp.eq.s32.totalorder %s29, 1
      %p99 = por %p97, %p98
      %p101 = scmp.ne.s32.totalorder %s86, %s100
      %p102 = scmp.eq.s32.totalorder %s29, 0
      %p103 = por %p101, %p102
      %s105 = sadd.s32 %s104, 1
      %p108 = scmp.eq.s32.totalorder %s23, 1
      %p109 = scmp.ne.s32.totalorder %s104, %s106
      %p110 = scmp.eq.s32.totalorder %s23, 0
      %p111 = por %p109, %p110
      %p112 = scmp.ne.s32.totalorder %s104, %s106
      %p113 = scmp.eq.s32.totalorder %s28, 1
      %p114 = por %p112, %p113
      %p115 = scmp.ne.s32.totalorder %s106, %s107
      %p116 = scmp.eq.s32.totalorder %s28, 0
      %p117 = por %p115, %p116
      %p118 = scmp.ne.s32.totalorder %s106, %s107
      %p119 = scmp.eq.s32.totalorder %s29, 1
      %p120 = por %p118, %p119
      %p122 = scmp.ne.s32.totalorder %s107, %s121
      %p123 = scmp.eq.s32.totalorder %s29, 0
      %p124 = por %p122, %p123
      %s126 = sadd.s32 %s125, 1
      %p129 = scmp.eq.s32.totalorder %s23, 1
      %p130 = scmp.ne.s32.totalorder %s125, %s127
      %p131 = scmp.eq.s32.totalorder %s23, 0
      %p132 = por %p130, %p131
      %p133 = scmp.ne.s32.totalorder %s125, %s127
      %p134 = scmp.eq.s32.totalorder %s28, 1
      %p135 = por %p133, %p134
      %p136 = scmp.ne.s32.totalorder %s127, %s128
      %p137 = scmp.eq.s32.totalorder %s28, 0
      %p138 = por %p136, %p137
      %p139 = scmp.ne.s32.totalorder %s127, %s128
      %p140 = scmp.eq.s32.totalorder %s29, 1
      %p141 = por %p139, %p140
      %p143 = scmp.ne.s32.totalorder %s128, %s142
      %p144 = scmp.eq.s32.totalorder %s29, 0
      %p145 = por %p143, %p144
      %s147 = sadd.s32 %s146, 1
      %p150 = scmp.eq.s32.totalorder %s23, 1
      %p151 = scmp.ne.s32.totalorder %s146, %s148
      %p152 = scmp.eq.s32.totalorder %s23, 0
      %p153 = por %p151, %p152
      %p154 = scmp.ne.s32.totalorder %s146, %s148
      %p155 = scmp.eq.s32.totalorder %s28, 1
      %p156 = por %p154, %p155
      %p157 = scmp.ne.s32.totalorder %s148, %s149
      %p158 = scmp.eq.s32.totalorder %s28, 0
      %p159 = por %p157, %p158
      %p160 = scmp.ne.s32.totalorder %s148, %s149
      %p161 = scmp.eq.s32.totalorder %s29, 1
      %p162 = por %p160, %p161
      %p164 = scmp.ne.s32.totalorder %s149, %s163
      %p165 = scmp.eq.s32.totalorder %s29, 0
      %p166 = por %p164, %p165
      %s168 = sadd.s32 %s167, 1
      %p171 = scmp.eq.s32.totalorder %s23, 1
      %p172 = scmp.ne.s32.totalorder %s167, %s169
      %p173 = scmp.eq.s32.totalorder %s23, 0
      %p174 = por %p172, %p173
      %p175 = scmp.ne.s32.totalorder %s167, %s169
      %p176 = scmp.eq.s32.totalorder %s28, 1
      %p177 = por %p175, %p176
      %p178 = scmp.ne.s32.totalorder %s169, %s170
      %p179 = scmp.eq.s32.totalorder %s28, 0
      %p180 = por %p178, %p179
      %p181 = scmp.ne.s32.totalorder %s169, %s170
      %p182 = scmp.eq.s32.totalorder %s29, 1
      %p183 = por %p181, %p182
      %p185 = scmp.ne.s32.totalorder %s170, %s184
      %p186 = scmp.eq.s32.totalorder %s29, 0
      %p187 = por %p185, %p186
      %s189 = sadd.s32 %s188, 1
      %p192 = scmp.eq.s32.totalorder %s23, 1
      %p193 = scmp.ne.s32.totalorder %s188, %s190
      %p194 = scmp.eq.s32.totalorder %s23, 0
      %p195 = por %p193, %p194
      %p196 = scmp.ne.s32.totalorder %s188, %s190
      %p197 = scmp.eq.s32.totalorder %s28, 1
      %p198 = por %p196, %p197
      %p199 = scmp.ne.s32.totalorder %s190, %s191
      %p200 = scmp.eq.s32.totalorder %s28, 0
      %p201 = por %p199, %p200
      %p202 = scmp.ne.s32.totalorder %s190, %s191
      %p203 = scmp.eq.s32.totalorder %s29, 1
      %p204 = por %p202, %p203
      %p206 = scmp.ne.s32.totalorder %s191, %s205
      %p207 = scmp.eq.s32.totalorder %s29, 0
      %p208 = por %p206, %p207
      %s209 = ssub.s32 %s23, %s30
      %p210 = scmp.eq.s32.totalorder %s209, 0
      %s212 = sadd.s32 %s211, 1
      %s213 = scalar_select %p210, %s211, %s212
      %p216 = pneg %p210
      %p217 = scmp.eq.s32.totalorder %s23, 1
      %p218 = por %p216, %p217
      %p219 = scmp.ne.s32.totalorder %s211, %s214
      %p220 = scmp.eq.s32.totalorder %s23, 0
      %p221 = por %p219, %p220
      %p222 = scmp.ne.s32.totalorder %s211, %s214
      %p223 = scmp.eq.s32.totalorder %s28, 1
      %p224 = por %p222, %p223
      %p225 = scmp.ne.s32.totalorder %s214, %s215
      %p226 = scmp.eq.s32.totalorder %s28, 0
      %p227 = por %p225, %p226
      %p228 = scmp.ne.s32.totalorder %s214, %s215
      %p229 = scmp.eq.s32.totalorder %s29, 1
      %p230 = por %p228, %p229
      %p232 = scmp.ne.s32.totalorder %s215, %s231
      %p233 = scmp.eq.s32.totalorder %s29, 0
      %p234 = por %p232, %p233
      %p235 = scmp.le.s32.totalorder 1, %s23
      %p236 = scmp.lt.s32.totalorder %s23, 3
      %p237 = pnand %p235, %p236
      %p238 = pneg %p237
      // Predicated region
      $region9: #{tpu_custom_call.1} parent=5 // pred_check
        _
      $region10: #{tpu_custom_call.1} parent=5 // pred_check_branch
        %240 = sbr.rel (%p237) target = $region12
      $region11: #{tpu_custom_call.1} parent=5 // pred_region
        %s241 = ssub.s32 %s23, 1
        // Predicated region
        $region13: #{tpu_custom_call.1} parent=11 // pred_check
          %p242 = pneg %p96
        $region14: #{tpu_custom_call.1} parent=11 // pred_check_branch
          %244 = sbr.rel (%p242) target = $region16
        $region15: #{tpu_custom_call.1} parent=11 // pred_region
          %s246 = ssub.s32 2048, 2048
          %247 = vsyncadd [#allocation6], %s246
          %s248 = sshll.u32 [#allocation7], 4
          %s249 = int_to_ptr.vmem [resolvable:$true] %s248
          %254 = dma.hbm_to_vmem [thread:$0]  %s2, 2048, %s249, [#allocation6], 64, 64, 4
        $region16: #{tpu_custom_call.1} parent=11 // pred_fallthru
          _
        // Predicated region
        $region17: #{tpu_custom_call.1} parent=11 // pred_check
          %p255 = pneg %p117
        $region18: #{tpu_custom_call.1} parent=11 // pred_check_branch
          %257 = sbr.rel (%p255) target = $region20
        $region19: #{tpu_custom_call.1} parent=11 // pred_region
          _
        $region20: #{tpu_custom_call.1} parent=11 // pred_fallthru
          _
        // Predicated region
        $region21: #{tpu_custom_call.1} parent=11 // pred_check
          %p258 = pneg %p138
        $region22: #{tpu_custom_call.1} parent=11 // pred_check_branch
          %260 = sbr.rel (%p258) target = $region24
        $region23: #{tpu_custom_call.1} parent=11 // pred_region
          _
        $region24: #{tpu_custom_call.1} parent=11 // pred_fallthru
          _
        // Predicated region
        $region25: #{tpu_custom_call.1} parent=11 // pred_check
          %p261 = pneg %p159
        $region26: #{tpu_custom_call.1} parent=11 // pred_check_branch
          %263 = sbr.rel (%p261) target = $region28
        $region27: #{tpu_custom_call.1} parent=11 // pred_region
          _
        $region28: #{tpu_custom_call.1} parent=11 // pred_fallthru
          _
        // Predicated region
        $region29: #{tpu_custom_call.1} parent=11 // pred_check
          %p264 = pneg %p180
        $region30: #{tpu_custom_call.1} parent=11 // pred_check_branch
          %266 = sbr.rel (%p264) target = $region32
        $region31: #{tpu_custom_call.1} parent=11 // pred_region
          _
        $region32: #{tpu_custom_call.1} parent=11 // pred_fallthru
          _
        // Predicated region
        $region33: #{tpu_custom_call.1} parent=11 // pred_check
          %p267 = pneg %p201
        $region34: #{tpu_custom_call.1} parent=11 // pred_check_branch
          %269 = sbr.rel (%p267) target = $region36
        $region35: #{tpu_custom_call.1} parent=11 // pred_region
          _
        $region36: #{tpu_custom_call.1} parent=11 // pred_fallthru
          _
      $region12: #{tpu_custom_call.1} parent=5 // pred_fallthru
        _
      %p270 = scmp.lt.s32.totalorder %s23, 2
      // Predicated region
      $region37: #{tpu_custom_call.1} parent=5 // pred_check
        %p271 = pneg %p270
      $region38: #{tpu_custom_call.1} parent=5 // pred_check_branch
        %273 = sbr.rel (%p271) target = $region40
      $region39: #{tpu_custom_call.1} parent=5 // pred_region
        // Predicated region
        $region41: #{tpu_custom_call.1} parent=39 // pred_check
          %p274 = pneg %p43
        $region42: #{tpu_custom_call.1} parent=39 // pred_check_branch
          %276 = sbr.rel (%p274) target = $region44
        $region43: #{tpu_custom_call.1} parent=39 // pred_region
          %s277 = sand.u32 %s33, 1
          %s278 = scalar_lea.sflag [#allocation3], %s277
          %s279 = sand.u32 %s33, 1
          %s280 = smul.addr %s279, 64
          %s281 = scalar_lea.vmem [#allocation2], %s280
          %s282 = smul.u32 8, %s23
          %s284 = ssub.s32 1024, 1024
          %285 = vsyncadd %s278, %s284
          %s286 = smul.addr %s282, 2
          %s287 = smul.addr %s286, 64
          %s288 = scalar_lea.hbm %s0, %s287
          %s289 = sshll.u32 %s281, 4
          %s290 = int_to_ptr.vmem [resolvable:$true] %s289
          %295 = dma.hbm_to_vmem [thread:$0]  %s288, 1024, %s290, %s278, 128, 128, 8
        $region44: #{tpu_custom_call.1} parent=39 // pred_fallthru
          _
        // Predicated region
        $region45: #{tpu_custom_call.1} parent=39 // pred_check
          %p296 = pneg %p69
        $region46: #{tpu_custom_call.1} parent=39 // pred_check_branch
          %298 = sbr.rel (%p296) target = $region48
        $region47: #{tpu_custom_call.1} parent=39 // pred_region
          %s299 = sand.u32 %s23, 1
          %s300 = scalar_lea.sflag [#allocation6], %s299
          %s301 = sand.u32 %s59, 1
          %s302 = smul.addr %s301, 64
          %s303 = scalar_lea.vmem [#allocation5], %s302
          %s304 = smul.u32 8, %s23
          %s306 = ssub.s32 1024, 1024
          %307 = vsyncadd %s300, %s306
          %s308 = smul.addr %s304, 2
          %s309 = smul.addr %s308, 64
          %s310 = scalar_lea.hbm %s1, %s309
          %s311 = sshll.u32 %s303, 4
          %s312 = int_to_ptr.vmem [resolvable:$true] %s311
          %317 = dma.hbm_to_vmem [thread:$0]  %s310, 1024, %s312, %s300, 128, 128, 8
        $region48: #{tpu_custom_call.1} parent=39 // pred_fallthru
          _
      $region40: #{tpu_custom_call.1} parent=5 // pred_fallthru
        _
      %p318 = scmp.le.s32.totalorder 1, %s23
      %p319 = scmp.lt.s32.totalorder %s23, 3
      %p320 = pnand %p318, %p319
      %p321 = pneg %p320
      // Predicated region
      $region49: #{tpu_custom_call.1} parent=5 // pred_check
        _
      $region50: #{tpu_custom_call.1} parent=5 // pred_check_branch
        %323 = sbr.rel (%p320) target = $region52
      $region51: #{tpu_custom_call.1} parent=5 // pred_region
        %s324 = ssub.s32 %s23, 1
        %s325 = sand.u32 %s36, 1
        %s326 = scalar_lea.sflag [#allocation3], %s325
        %s327 = sand.u32 %s36, 1
        %s328 = smul.addr %s327, 64
        %s329 = scalar_lea.vmem [#allocation2], %s328
        // Predicated region
        $region53: #{tpu_custom_call.1} parent=51 // pred_check
          %p330 = pneg %p49
        $region54: #{tpu_custom_call.1} parent=51 // pred_check_branch
          %332 = sbr.rel (%p330) target = $region56
        $region55: #{tpu_custom_call.1} parent=51 // pred_region
          %333 = dma.done %s326, 1024
        $region56: #{tpu_custom_call.1} parent=51 // pred_fallthru
          _
        %s334 = sand.u32 %s28, 1
        %s335 = scalar_lea.sflag [#allocation6], %s334
        %s336 = sand.u32 %s62, 1
        %s337 = smul.addr %s336, 64
        %s338 = scalar_lea.vmem [#allocation5], %s337
        // Predicated region
        $region57: #{tpu_custom_call.1} parent=51 // pred_check
          %p339 = pneg %p75
        $region58: #{tpu_custom_call.1} parent=51 // pred_check_branch
          %341 = sbr.rel (%p339) target = $region60
        $region59: #{tpu_custom_call.1} parent=51 // pred_region
          %342 = dma.done %s335, 1024
        $region60: #{tpu_custom_call.1} parent=51 // pred_fallthru
          _
        // Predicated region
        $region61: #{tpu_custom_call.1} parent=51 // pred_check
          %p343 = pneg %p96
        $region62: #{tpu_custom_call.1} parent=51 // pred_check_branch
          %345 = sbr.rel (%p343) target = $region64
        $region63: #{tpu_custom_call.1} parent=51 // pred_region
          %346 = dma.done [#allocation6], 2048
        $region64: #{tpu_custom_call.1} parent=51 // pred_fallthru
          _
        %s347 = sand.u32 %s36, 1
        %s348 = scalar_lea.sflag [#allocation3], %s347
        %s349 = sand.u32 %s36, 1
        %s350 = smul.addr %s349, 64
        %s351 = scalar_lea.vmem [#allocation2], %s350
        %p352 = pneg %p49
        %p353 = pneg %p46
        %s354 = sand.u32 %s28, 1
        %s355 = scalar_lea.sflag [#allocation6], %s354
        %s356 = sand.u32 %s62, 1
        %s357 = smul.addr %s356, 64
        %s358 = scalar_lea.vmem [#allocation5], %s357
        %p359 = pneg %p75
        %p360 = pneg %p72
        %p361 = pneg %p96
        %p362 = pneg %p93
        %p363 = pneg %p117
        %p364 = pneg %p114
        %p365 = pneg %p138
        %p366 = pneg %p135
        %p367 = pneg %p159
        %p368 = pneg %p156
        %p369 = pneg %p180
        %p370 = pneg %p177
        %p371 = pneg %p201
        %p372 = pneg %p198
        %p373 = pneg %p227
        %p374 = pneg %p224
        %s375 = sand.u32 %s214, 1
        %s376 = scalar_lea.sflag [#allocation4], %s375
        %s377 = sand.u32 %s214, 1
        %s378 = smul.addr %s377, 128
        %s379 = scalar_lea.vmem [#allocation8], %s378
        %s380 = smul.u32 8, %s28
        %s381 = smul.u32 8, %s28
        %s382 = smul.u32 8, %s28
        %v384 = vld [vmem:[%s329] sm:$0xff]
        %v385 = vld [vmem:[%s329 + $0x8] sm:$0xff]
        %v386 = vld [vmem:[%s329 + $0x10] sm:$0xff]
        %v387 = vld [vmem:[%s329 + $0x18] sm:$0xff]
        %v388 = vld [vmem:[%s329 + $0x20] sm:$0xff]
        %v389 = vld [vmem:[%s329 + $0x28] sm:$0xff]
        %v390 = vld [vmem:[%s329 + $0x30] sm:$0xff]
        %v391 = vld [vmem:[%s329 + $0x38] sm:$0xff]
        %v392 = vld [vmem:[#allocation7] sm:$0xf]
        %v393 = vld [vmem:[#allocation7 + $0x4] sm:$0xf]
        %v394 = vld [vmem:[#allocation7 + $0x8] sm:$0xf]
        %v395 = vld [vmem:[#allocation7 + $0xc] sm:$0xf]
        %v396 = vld [vmem:[#allocation7 + $0x10] sm:$0xf]
        %v397 = vld [vmem:[#allocation7 + $0x14] sm:$0xf]
        %v398 = vld [vmem:[#allocation7 + $0x18] sm:$0xf]
        %v399 = vld [vmem:[#allocation7 + $0x1c] sm:$0xf]
        %v400 = vld [vmem:[#allocation7 + $0x20] sm:$0xf]
        %v401 = vld [vmem:[#allocation7 + $0x24] sm:$0xf]
        %v402 = vld [vmem:[#allocation7 + $0x28] sm:$0xf]
        %v403 = vld [vmem:[#allocation7 + $0x2c] sm:$0xf]
        %v404 = vld [vmem:[#allocation7 + $0x30] sm:$0xf]
        %v405 = vld [vmem:[#allocation7 + $0x34] sm:$0xf]
        %v406 = vld [vmem:[#allocation7 + $0x38] sm:$0xf]
        %v407 = vld [vmem:[#allocation7 + $0x3c] sm:$0xf]
        %v408 = vld [vmem:[#allocation7 + $0x40] sm:$0xf]
        %v409 = vld [vmem:[#allocation7 + $0x44] sm:$0xf]
        %v410 = vld [vmem:[#allocation7 + $0x48] sm:$0xf]
        %v411 = vld [vmem:[#allocation7 + $0x4c] sm:$0xf]
        %v412 = vld [vmem:[#allocation7 + $0x50] sm:$0xf]
        %v413 = vld [vmem:[#allocation7 + $0x54] sm:$0xf]
        %v414 = vld [vmem:[#allocation7 + $0x58] sm:$0xf]
        %v415 = vld [vmem:[#allocation7 + $0x5c] sm:$0xf]
        %v416 = vld [vmem:[#allocation7 + $0x60] sm:$0xf]
        %v417 = vld [vmem:[#allocation7 + $0x64] sm:$0xf]
        %v418 = vld [vmem:[#allocation7 + $0x68] sm:$0xf]
        %v419 = vld [vmem:[#allocation7 + $0x6c] sm:$0xf]
        %v420 = vld [vmem:[#allocation7 + $0x70] sm:$0xf]
        %v421 = vld [vmem:[#allocation7 + $0x74] sm:$0xf]
        %v422 = vld [vmem:[#allocation7 + $0x78] sm:$0xf]
        %v423 = vld [vmem:[#allocation7 + $0x7c] sm:$0xf]
        %v424 = vld [vmem:[%s3] sm:$0x1]
        %v426 = vlaneseq
        %v427 = vshrl.u32 %v426, 7
        %v428 = vsub.s32 0, %v427
        %v429 = vrot.slane %v424, %v428
        %v439 = vunpack.c.l.b16 %v384
        %v440 = vunpack.c.h.b16 %v384
        %v441 = vunpack.c.l.b16 %v385
        %v442 = vunpack.c.h.b16 %v385
        %v443 = vunpack.c.l.b16 %v386
        %v444 = vunpack.c.h.b16 %v386
        %v445 = vunpack.c.l.b16 %v387
        %v446 = vunpack.c.h.b16 %v387
        %v447 = vunpack.c.l.b16 %v388
        %v448 = vunpack.c.h.b16 %v388
        %v449 = vunpack.c.l.b16 %v389
        %v450 = vunpack.c.h.b16 %v389
        %v451 = vunpack.c.l.b16 %v390
        %v452 = vunpack.c.h.b16 %v390
        %v453 = vunpack.c.l.b16 %v391
        %v454 = vunpack.c.h.b16 %v391
        %v455 = vpack.c.b16 %v441, %v439
        %v456 = vpack.c.b16 %v442, %v440
        %v457 = vpack.c.b16 %v445, %v443
        %v458 = vpack.c.b16 %v446, %v444
        %v459 = vpack.c.b16 %v449, %v447
        %v460 = vpack.c.b16 %v450, %v448
        %v461 = vpack.c.b16 %v453, %v451
        %v462 = vpack.c.b16 %v454, %v452
        %v503 = vunpack.c.l.b16 %v392
        %v504 = vunpack.c.l.b16 %v393
        %v505 = vunpack.c.l.b16 %v394
        %v506 = vunpack.c.l.b16 %v395
        %v507 = vunpack.c.l.b16 %v396
        %v508 = vunpack.c.l.b16 %v397
        %v509 = vunpack.c.l.b16 %v398
        %v510 = vunpack.c.l.b16 %v399
        %v511 = vunpack.c.l.b16 %v400
        %v512 = vunpack.c.l.b16 %v401
        %v513 = vunpack.c.l.b16 %v402
        %v514 = vunpack.c.l.b16 %v403
        %v515 = vunpack.c.l.b16 %v404
        %v516 = vunpack.c.l.b16 %v405
        %v517 = vunpack.c.l.b16 %v406
        %v518 = vunpack.c.l.b16 %v407
        %v519 = vunpack.c.l.b16 %v408
        %v520 = vunpack.c.l.b16 %v409
        %v521 = vunpack.c.l.b16 %v410
        %v522 = vunpack.c.l.b16 %v411
        %v523 = vunpack.c.l.b16 %v412
        %v524 = vunpack.c.l.b16 %v413
        %v525 = vunpack.c.l.b16 %v414
        %v526 = vunpack.c.l.b16 %v415
        %v527 = vunpack.c.l.b16 %v416
        %v528 = vunpack.c.l.b16 %v417
        %v529 = vunpack.c.l.b16 %v418
        %v530 = vunpack.c.l.b16 %v419
        %v531 = vunpack.c.l.b16 %v420
        %v532 = vunpack.c.l.b16 %v421
        %v533 = vunpack.c.l.b16 %v422
        %v534 = vunpack.c.l.b16 %v423
        %v535 = vpack.c.b16 %v504, %v503
        %v536 = vpack.c.b16 %v506, %v505
        %v537 = vpack.c.b16 %v508, %v507
        %v538 = vpack.c.b16 %v510, %v509
        %v539 = vpack.c.b16 %v512, %v511
        %v540 = vpack.c.b16 %v514, %v513
        %v541 = vpack.c.b16 %v516, %v515
        %v542 = vpack.c.b16 %v518, %v517
        %v543 = vpack.c.b16 %v520, %v519
        %v544 = vpack.c.b16 %v522, %v521
        %v545 = vpack.c.b16 %v524, %v523
        %v546 = vpack.c.b16 %v526, %v525
        %v547 = vpack.c.b16 %v528, %v527
        %v548 = vpack.c.b16 %v530, %v529
        %v549 = vpack.c.b16 %v532, %v531
        %v550 = vpack.c.b16 %v534, %v533
        %567 = vmatprep.subr.bf16.mxu0 0
        %568 = vmatpush1.bf16.msra.mxu0 %v542
        %569 = vmatprep.subr.bf16.mxu0 0
        %570 = vmatpush1.bf16.msra.mxu0 %v541
        %571 = vmatprep.subr.bf16.mxu0 0
        %572 = vmatpush1.bf16.msra.mxu0 %v540
        %573 = vmatprep.subr.bf16.mxu0 0
        %574 = vmatpush1.bf16.msra.mxu0 %v539
        %575 = vmatprep.subr.bf16.mxu0 0
        %576 = vmatpush1.bf16.msra.mxu0 %v538
        %577 = vmatprep.subr.bf16.mxu0 0
        %578 = vmatpush1.bf16.msra.mxu0 %v537
        %579 = vmatprep.subr.bf16.mxu0 0
        %580 = vmatpush1.bf16.msra.mxu0 %v536
        %581 = vmatprep.subr.bf16.mxu0 0
        %582 = vmatpush1.bf16.msra.mxu0 %v535
        %583 = vmatprep.subr.bf16.mxu0 0
        %584 = vmatpush2.bf16.msra.mxu0 %v550
        %585 = vmatprep.subr.bf16.mxu0 0
        %586 = vmatpush2.bf16.msra.mxu0 %v549
        %587 = vmatprep.subr.bf16.mxu0 0
        %588 = vmatpush2.bf16.msra.mxu0 %v548
        %589 = vmatprep.subr.bf16.mxu0 0
        %590 = vmatpush2.bf16.msra.mxu0 %v547
        %591 = vmatprep.subr.bf16.mxu0 0
        %592 = vmatpush2.bf16.msra.mxu0 %v546
        %593 = vmatprep.subr.bf16.mxu0 0
        %594 = vmatpush2.bf16.msra.mxu0 %v545
        %595 = vmatprep.subr.bf16.mxu0 0
        %596 = vmatpush2.bf16.msra.mxu0 %v544
        %597 = vmatprep.subr.bf16.mxu0 0
        %598 = vmatpush2.bf16.msra.mxu0 %v543
        %599 = vmatprep.mubr.bf16.mxu0 %v456
        %600 = vmatmul.mubr.bf16.gmra.mxu0 %v455
        %v601 = vpop.f32.mrf.mxu0
        %v602 = vadd.f32 %v429, %v601
        %v603 = vpop.f32.mrf.mxu0
        %v604 = vpop.f32.mrf.mxu0
        %v605 = vadd.f32 %v429, %v604
        %v606 = vpop.f32.mrf.mxu0
        %607 = vmatprep.mubr.bf16.mxu0 %v458
        %608 = vmatmul.mubr.bf16.gmra.mxu0 %v457
        %v609 = vpop.f32.mrf.mxu0
        %v610 = vadd.f32 %v429, %v609
        %v611 = vpop.f32.mrf.mxu0
        %v612 = vpop.f32.mrf.mxu0
        %v613 = vadd.f32 %v429, %v612
        %v614 = vpop.f32.mrf.mxu0
        %615 = vmatprep.mubr.bf16.mxu0 %v460
        %616 = vmatmul.mubr.bf16.gmra.mxu0 %v459
        %v617 = vpop.f32.mrf.mxu0
        %v618 = vadd.f32 %v429, %v617
        %v619 = vpop.f32.mrf.mxu0
        %v620 = vpop.f32.mrf.mxu0
        %v621 = vadd.f32 %v429, %v620
        %v622 = vpop.f32.mrf.mxu0
        %623 = vmatprep.mubr.bf16.mxu0 %v462
        %624 = vmatmul.mubr.bf16.gmra.mxu0 %v461
        %v625 = vpop.f32.mrf.mxu0
        %v626 = vadd.f32 %v429, %v625
        %v627 = vpop.f32.mrf.mxu0
        %v628 = vpop.f32.mrf.mxu0
        %v629 = vadd.f32 %v429, %v628
        %v630 = vpop.f32.mrf.mxu0
        %631 = vdwg.mxu0
        %v632 = vld [vmem:[%s338] sm:$0xff]
        %v633 = vld [vmem:[%s338 + $0x8] sm:$0xff]
        %v634 = vld [vmem:[%s338 + $0x10] sm:$0xff]
        %v635 = vld [vmem:[%s338 + $0x18] sm:$0xff]
        %v636 = vld [vmem:[%s338 + $0x20] sm:$0xff]
        %v637 = vld [vmem:[%s338 + $0x28] sm:$0xff]
        %v638 = vld [vmem:[%s338 + $0x30] sm:$0xff]
        %v639 = vld [vmem:[%s338 + $0x38] sm:$0xff]
        %v640 = vunpack.c.l.bf16 %v632
        %v641 = vunpack.c.h.bf16 %v632
        %v642 = vunpack.c.l.bf16 %v633
        %v643 = vunpack.c.h.bf16 %v633
        %v644 = vunpack.c.l.bf16 %v634
        %v645 = vunpack.c.h.bf16 %v634
        %v646 = vunpack.c.l.bf16 %v635
        %v647 = vunpack.c.h.bf16 %v635
        %v648 = vunpack.c.l.bf16 %v636
        %v649 = vunpack.c.h.bf16 %v636
        %v650 = vunpack.c.l.bf16 %v637
        %v651 = vunpack.c.h.bf16 %v637
        %v652 = vunpack.c.l.bf16 %v638
        %v653 = vunpack.c.h.bf16 %v638
        %v654 = vunpack.c.l.bf16 %v639
        %v655 = vunpack.c.h.bf16 %v639
        %656 = vrot.lane.b32.xlu0 %v640, 1
        %v657 = vpop.permute.xlu0 %656
        %658 = vrot.lane.b32.xlu0 %v642, 1
        %v659 = vpop.permute.xlu0 %658
        %660 = vrot.lane.b32.xlu0 %v644, 1
        %v661 = vpop.permute.xlu0 %660
        %662 = vrot.lane.b32.xlu0 %v646, 1
        %v663 = vpop.permute.xlu0 %662
        %664 = vrot.lane.b32.xlu0 %v648, 1
        %v665 = vpop.permute.xlu0 %664
        %666 = vrot.lane.b32.xlu0 %v650, 1
        %v667 = vpop.permute.xlu0 %666
        %668 = vrot.lane.b32.xlu0 %v652, 1
        %v669 = vpop.permute.xlu0 %668
        %670 = vrot.lane.b32.xlu0 %v654, 1
        %v671 = vpop.permute.xlu0 %670
        %672 = vrot.lane.b32.xlu0 %v641, 1
        %v673 = vpop.permute.xlu0 %672
        %674 = vrot.lane.b32.xlu0 %v643, 1
        %v675 = vpop.permute.xlu0 %674
        %676 = vrot.lane.b32.xlu0 %v645, 1
        %v677 = vpop.permute.xlu0 %676
        %678 = vrot.lane.b32.xlu0 %v647, 1
        %v679 = vpop.permute.xlu0 %678
        %680 = vrot.lane.b32.xlu0 %v649, 1
        %v681 = vpop.permute.xlu0 %680
        %682 = vrot.lane.b32.xlu0 %v651, 1
        %v683 = vpop.permute.xlu0 %682
        %684 = vrot.lane.b32.xlu0 %v653, 1
        %v685 = vpop.permute.xlu0 %684
        %686 = vrot.lane.b32.xlu0 %v655, 1
        %v687 = vpop.permute.xlu0 %686
        %v688 = vlaneseq
        %v689 = vand.u32 %v688, 127
        %vm690 = vcmp.lt.s32.totalorder %v689, 1
        %v691 = vsel %vm690, %v657, %v673
        %v692 = vsel %vm690, %v659, %v675
        %v693 = vsel %vm690, %v661, %v677
        %v694 = vsel %vm690, %v663, %v679
        %v695 = vsel %vm690, %v665, %v681
        %v696 = vsel %vm690, %v667, %v683
        %v697 = vsel %vm690, %v669, %v685
        %v698 = vsel %vm690, %v671, %v687
        %v699 = vsel %vm690, %v673, %v657
        %v700 = vsel %vm690, %v675, %v659
        %v701 = vsel %vm690, %v677, %v661
        %v702 = vsel %vm690, %v679, %v663
        %v703 = vsel %vm690, %v681, %v665
        %v704 = vsel %vm690, %v683, %v667
        %v705 = vsel %vm690, %v685, %v669
        %v706 = vsel %vm690, %v687, %v671
        %v707 = vld [vmem:[%s6] sm:$0x3]
        %v709 = vlaneseq
        %v710 = vshrl.u32 %v709, 7
        %v711 = vsub.s32 0, %v710
        %v712 = vrot.slane %v707, %v711
        %v713 = vlaneseq
        %v714 = vshrl.u32 %v713, 7
        %v715 = vsub.s32 1, %v714
        %v716 = vrot.slane %v707, %v715
        %v719 = vmul.f32 %v699, %v712
        %v720 = vmul.f32 %v691, %v716
        %v721 = vmul.f32 %v700, %v712
        %v722 = vmul.f32 %v692, %v716
        %v723 = vmul.f32 %v701, %v712
        %v724 = vmul.f32 %v693, %v716
        %v725 = vmul.f32 %v702, %v712
        %v726 = vmul.f32 %v694, %v716
        %v727 = vmul.f32 %v703, %v712
        %v728 = vmul.f32 %v695, %v716
        %v729 = vmul.f32 %v704, %v712
        %v730 = vmul.f32 %v696, %v716
        %v731 = vmul.f32 %v705, %v712
        %v732 = vmul.f32 %v697, %v716
        %v733 = vmul.f32 %v706, %v712
        %v734 = vmul.f32 %v698, %v716
        %735 = vrot.lane.b32.xlu0 %v640, 127
        %v736 = vpop.permute.xlu0 %735
        %737 = vrot.lane.b32.xlu0 %v642, 127
        %v738 = vpop.permute.xlu0 %737
        %739 = vrot.lane.b32.xlu0 %v644, 127
        %v740 = vpop.permute.xlu0 %739
        %741 = vrot.lane.b32.xlu0 %v646, 127
        %v742 = vpop.permute.xlu0 %741
        %743 = vrot.lane.b32.xlu0 %v648, 127
        %v744 = vpop.permute.xlu0 %743
        %745 = vrot.lane.b32.xlu0 %v650, 127
        %v746 = vpop.permute.xlu0 %745
        %747 = vrot.lane.b32.xlu0 %v652, 127
        %v748 = vpop.permute.xlu0 %747
        %749 = vrot.lane.b32.xlu0 %v654, 127
        %v750 = vpop.permute.xlu0 %749
        %751 = vrot.lane.b32.xlu0 %v641, 127
        %v752 = vpop.permute.xlu0 %751
        %753 = vrot.lane.b32.xlu0 %v643, 127
        %v754 = vpop.permute.xlu0 %753
        %755 = vrot.lane.b32.xlu0 %v645, 127
        %v756 = vpop.permute.xlu0 %755
        %757 = vrot.lane.b32.xlu0 %v647, 127
        %v758 = vpop.permute.xlu0 %757
        %759 = vrot.lane.b32.xlu0 %v649, 127
        %v760 = vpop.permute.xlu0 %759
        %761 = vrot.lane.b32.xlu0 %v651, 127
        %v762 = vpop.permute.xlu0 %761
        %763 = vrot.lane.b32.xlu0 %v653, 127
        %v764 = vpop.permute.xlu0 %763
        %765 = vrot.lane.b32.xlu0 %v655, 127
        %v766 = vpop.permute.xlu0 %765
        %vm767 = vcmp.lt.s32.totalorder %v689, 127
        %v768 = vsel %vm767, %v736, %v752
        %v769 = vsel %vm767, %v738, %v754
        %v770 = vsel %vm767, %v740, %v756
        %v771 = vsel %vm767, %v742, %v758
        %v772 = vsel %vm767, %v744, %v760
        %v773 = vsel %vm767, %v746, %v762
        %v774 = vsel %vm767, %v748, %v764
        %v775 = vsel %vm767, %v750, %v766
        %v776 = vsel %vm767, %v752, %v736
        %v777 = vsel %vm767, %v754, %v738
        %v778 = vsel %vm767, %v756, %v740
        %v779 = vsel %vm767, %v758, %v742
        %v780 = vsel %vm767, %v760, %v744
        %v781 = vsel %vm767, %v762, %v746
        %v782 = vsel %vm767, %v764, %v748
        %v783 = vsel %vm767, %v766, %v750
        %v784 = vld [vmem:[%s7] sm:$0x3]
        %v786 = vlaneseq
        %v787 = vshrl.u32 %v786, 7
        %v788 = vsub.s32 0, %v787
        %v789 = vrot.slane %v784, %v788
        %v790 = vlaneseq
        %v791 = vshrl.u32 %v790, 7
        %v792 = vsub.s32 1, %v791
        %v793 = vrot.slane %v784, %v792
        %v796 = vmul.f32 %v768, %v789
        %v797 = vmul.f32 %v776, %v793
        %v798 = vmul.f32 %v769, %v789
        %v799 = vmul.f32 %v777, %v793
        %v800 = vmul.f32 %v770, %v789
        %v801 = vmul.f32 %v778, %v793
        %v802 = vmul.f32 %v771, %v789
        %v803 = vmul.f32 %v779, %v793
        %v804 = vmul.f32 %v772, %v789
        %v805 = vmul.f32 %v780, %v793
        %v806 = vmul.f32 %v773, %v789
        %v807 = vmul.f32 %v781, %v793
        %v808 = vmul.f32 %v774, %v789
        %v809 = vmul.f32 %v782, %v793
        %v810 = vmul.f32 %v775, %v789
        %v811 = vmul.f32 %v783, %v793
        %813 = vset.pattern.permute.xlu0 64
        %814 = vperm.xlu0 %813, %v602
        %v815 = vpop.permute.xlu0 %814
        %818 = vset.pattern.permute.xlu0 64
        %819 = vperm.xlu0 %818, %v605
        %v820 = vpop.permute.xlu0 %819
        %823 = vset.pattern.permute.xlu0 64
        %824 = vperm.xlu0 %823, %v610
        %v825 = vpop.permute.xlu0 %824
        %828 = vset.pattern.permute.xlu0 64
        %829 = vperm.xlu0 %828, %v613
        %v830 = vpop.permute.xlu0 %829
        %833 = vset.pattern.permute.xlu0 64
        %834 = vperm.xlu0 %833, %v618
        %v835 = vpop.permute.xlu0 %834
        %838 = vset.pattern.permute.xlu0 64
        %839 = vperm.xlu0 %838, %v621
        %v840 = vpop.permute.xlu0 %839
        %843 = vset.pattern.permute.xlu0 64
        %844 = vperm.xlu0 %843, %v626
        %v845 = vpop.permute.xlu0 %844
        %848 = vset.pattern.permute.xlu0 64
        %849 = vperm.xlu0 %848, %v629
        %v850 = vpop.permute.xlu0 %849
        %v852 = vmul.f32 %v815, %v719
        %v853 = vmul.f32 %v815, %v720
        %v854 = vmul.f32 %v820, %v721
        %v855 = vmul.f32 %v820, %v722
        %v856 = vmul.f32 %v825, %v723
        %v857 = vmul.f32 %v825, %v724
        %v858 = vmul.f32 %v830, %v725
        %v859 = vmul.f32 %v830, %v726
        %v860 = vmul.f32 %v835, %v727
        %v861 = vmul.f32 %v835, %v728
        %v862 = vmul.f32 %v840, %v729
        %v863 = vmul.f32 %v840, %v730
        %v864 = vmul.f32 %v845, %v731
        %v865 = vmul.f32 %v845, %v732
        %v866 = vmul.f32 %v850, %v733
        %v867 = vmul.f32 %v850, %v734
        %868 = vset.pattern.permute.xlu0 65
        %869 = vperm.xlu0 %868, %v602
        %v870 = vpop.permute.xlu0 %869
        %872 = vset.pattern.permute.xlu0 65
        %873 = vperm.xlu0 %872, %v605
        %v874 = vpop.permute.xlu0 %873
        %876 = vset.pattern.permute.xlu0 65
        %877 = vperm.xlu0 %876, %v610
        %v878 = vpop.permute.xlu0 %877
        %880 = vset.pattern.permute.xlu0 65
        %881 = vperm.xlu0 %880, %v613
        %v882 = vpop.permute.xlu0 %881
        %884 = vset.pattern.permute.xlu0 65
        %885 = vperm.xlu0 %884, %v618
        %v886 = vpop.permute.xlu0 %885
        %888 = vset.pattern.permute.xlu0 65
        %889 = vperm.xlu0 %888, %v621
        %v890 = vpop.permute.xlu0 %889
        %892 = vset.pattern.permute.xlu0 65
        %893 = vperm.xlu0 %892, %v626
        %v894 = vpop.permute.xlu0 %893
        %896 = vset.pattern.permute.xlu0 65
        %897 = vperm.xlu0 %896, %v629
        %v898 = vpop.permute.xlu0 %897
        %v900 = vmul.f32 %v870, %v640
        %v901 = vmul.f32 %v870, %v641
        %v902 = vmul.f32 %v874, %v642
        %v903 = vmul.f32 %v874, %v643
        %v904 = vmul.f32 %v878, %v644
        %v905 = vmul.f32 %v878, %v645
        %v906 = vmul.f32 %v882, %v646
        %v907 = vmul.f32 %v882, %v647
        %v908 = vmul.f32 %v886, %v648
        %v909 = vmul.f32 %v886, %v649
        %v910 = vmul.f32 %v890, %v650
        %v911 = vmul.f32 %v890, %v651
        %v912 = vmul.f32 %v894, %v652
        %v913 = vmul.f32 %v894, %v653
        %v914 = vmul.f32 %v898, %v654
        %v915 = vmul.f32 %v898, %v655
        %v916 = vadd.f32 %v852, %v900
        %v917 = vadd.f32 %v853, %v901
        %v918 = vadd.f32 %v854, %v902
        %v919 = vadd.f32 %v855, %v903
        %v920 = vadd.f32 %v856, %v904
        %v921 = vadd.f32 %v857, %v905
        %v922 = vadd.f32 %v858, %v906
        %v923 = vadd.f32 %v859, %v907
        %v924 = vadd.f32 %v860, %v908
        %v925 = vadd.f32 %v861, %v909
        %v926 = vadd.f32 %v862, %v910
        %v927 = vadd.f32 %v863, %v911
        %v928 = vadd.f32 %v864, %v912
        %v929 = vadd.f32 %v865, %v913
        %v930 = vadd.f32 %v866, %v914
        %v931 = vadd.f32 %v867, %v915
        %932 = vset.pattern.permute.xlu0 66
        %933 = vperm.xlu0 %932, %v602
        %v934 = vpop.permute.xlu0 %933
        %936 = vset.pattern.permute.xlu0 66
        %937 = vperm.xlu0 %936, %v605
        %v938 = vpop.permute.xlu0 %937
        %940 = vset.pattern.permute.xlu0 66
        %941 = vperm.xlu0 %940, %v610
        %v942 = vpop.permute.xlu0 %941
        %944 = vset.pattern.permute.xlu0 66
        %945 = vperm.xlu0 %944, %v613
        %v946 = vpop.permute.xlu0 %945
        %948 = vset.pattern.permute.xlu0 66
        %949 = vperm.xlu0 %948, %v618
        %v950 = vpop.permute.xlu0 %949
        %952 = vset.pattern.permute.xlu0 66
        %953 = vperm.xlu0 %952, %v621
        %v954 = vpop.permute.xlu0 %953
        %956 = vset.pattern.permute.xlu0 66
        %957 = vperm.xlu0 %956, %v626
        %v958 = vpop.permute.xlu0 %957
        %960 = vset.pattern.permute.xlu0 66
        %961 = vperm.xlu0 %960, %v629
        %v962 = vpop.permute.xlu0 %961
        %v964 = vmul.f32 %v934, %v796
        %v965 = vmul.f32 %v934, %v797
        %v966 = vmul.f32 %v938, %v798
        %v967 = vmul.f32 %v938, %v799
        %v968 = vmul.f32 %v942, %v800
        %v969 = vmul.f32 %v942, %v801
        %v970 = vmul.f32 %v946, %v802
        %v971 = vmul.f32 %v946, %v803
        %v972 = vmul.f32 %v950, %v804
        %v973 = vmul.f32 %v950, %v805
        %v974 = vmul.f32 %v954, %v806
        %v975 = vmul.f32 %v954, %v807
        %v976 = vmul.f32 %v958, %v808
        %v977 = vmul.f32 %v958, %v809
        %v978 = vmul.f32 %v962, %v810
        %v979 = vmul.f32 %v962, %v811
        %v980 = vadd.f32 %v916, %v964
        %v981 = vadd.f32 %v917, %v965
        %v982 = vadd.f32 %v918, %v966
        %v983 = vadd.f32 %v919, %v967
        %v984 = vadd.f32 %v920, %v968
        %v985 = vadd.f32 %v921, %v969
        %v986 = vadd.f32 %v922, %v970
        %v987 = vadd.f32 %v923, %v971
        %v988 = vadd.f32 %v924, %v972
        %v989 = vadd.f32 %v925, %v973
        %v990 = vadd.f32 %v926, %v974
        %v991 = vadd.f32 %v927, %v975
        %v992 = vadd.f32 %v928, %v976
        %v993 = vadd.f32 %v929, %v977
        %v994 = vadd.f32 %v930, %v978
        %v995 = vadd.f32 %v931, %v979
        %v996 = vmax.f32 %v980, 0.0
        %v997 = vmax.f32 %v981, 0.0
        %v998 = vmax.f32 %v982, 0.0
        %v999 = vmax.f32 %v983, 0.0
        %v1000 = vmax.f32 %v984, 0.0
        %v1001 = vmax.f32 %v985, 0.0
        %v1002 = vmax.f32 %v986, 0.0
        %v1003 = vmax.f32 %v987, 0.0
        %v1004 = vmax.f32 %v988, 0.0
        %v1005 = vmax.f32 %v989, 0.0
        %v1006 = vmax.f32 %v990, 0.0
        %v1007 = vmax.f32 %v991, 0.0
        %v1008 = vmax.f32 %v992, 0.0
        %v1009 = vmax.f32 %v993, 0.0
        %v1010 = vmax.f32 %v994, 0.0
        %v1011 = vmax.f32 %v995, 0.0
        %v1012 = vpack.c.bf16 %v605, %v602
        %v1013 = vpack.c.bf16 %v613, %v610
        %v1014 = vpack.c.bf16 %v621, %v618
        %v1015 = vpack.c.bf16 %v629, %v626
        %v1016 = vpack.c.bf16 %v998, %v996
        %v1017 = vpack.c.bf16 %v999, %v997
        %v1018 = vpack.c.bf16 %v1002, %v1000
        %v1019 = vpack.c.bf16 %v1003, %v1001
        %v1020 = vpack.c.bf16 %v1006, %v1004
        %v1021 = vpack.c.bf16 %v1007, %v1005
        %v1022 = vpack.c.bf16 %v1010, %v1008
        %v1023 = vpack.c.bf16 %v1011, %v1009
        %vm1024 = vcmask 523264
        %v1026 = vsel %vm1024, %v1012, 0
        %v1029 = vsel %vm1024, %v1013, 0
        %v1032 = vsel %vm1024, %v1014, 0
        %v1035 = vsel %vm1024, %v1015, 0
        %1037 = vmatprep.subr.bf16.mxu0 0
        %1038 = vmatpush1.bf16.msra.mxu0 0
        %1039 = vmatprep.subr.bf16.mxu0 0
        %1040 = vmatpush1.bf16.msra.mxu0 0
        %1041 = vmatprep.subr.bf16.mxu0 0
        %1042 = vmatpush1.bf16.msra.mxu0 0
        %1043 = vmatprep.subr.bf16.mxu0 0
        %1044 = vmatpush1.bf16.msra.mxu0 0
        %1045 = vmatprep.subr.bf16.mxu0 %v1023
        %1046 = vmatpush1.bf16.msra.mxu0 %v1022
        %1047 = vmatprep.subr.bf16.mxu0 %v1021
        %1048 = vmatpush1.bf16.msra.mxu0 %v1020
        %1049 = vmatprep.subr.bf16.mxu0 %v1019
        %1050 = vmatpush1.bf16.msra.mxu0 %v1018
        %1051 = vmatprep.subr.bf16.mxu0 %v1017
        %1052 = vmatpush1.bf16.msra.mxu0 %v1016
        %1053 = vmatprep.subr.bf16.mxu0 0
        %1054 = vmatpush2.bf16.msra.mxu0 0
        %1055 = vmatprep.subr.bf16.mxu0 0
        %1056 = vmatpush2.bf16.msra.mxu0 0
        %1057 = vmatprep.subr.bf16.mxu0 0
        %1058 = vmatpush2.bf16.msra.mxu0 0
        %1059 = vmatprep.subr.bf16.mxu0 0
        %1060 = vmatpush2.bf16.msra.mxu0 0
        %1061 = vmatprep.subr.bf16.mxu0 0
        %1062 = vmatpush2.bf16.msra.mxu0 0
        %1063 = vmatprep.subr.bf16.mxu0 0
        %1064 = vmatpush2.bf16.msra.mxu0 0
        %1065 = vmatprep.subr.bf16.mxu0 0
        %1066 = vmatpush2.bf16.msra.mxu0 0
        %1067 = vmatprep.subr.bf16.mxu0 0
        %1068 = vmatpush2.bf16.msra.mxu0 0
        %1069 = vmatprep.mubr.bf16.mxu0 0
        %1070 = vmatmul.mubr.bf16.gmra.mxu0 %v1026
        %v1071 = vpop.f32.mrf.mxu0
        %v1072 = vadd.f32 0.0, %v1071
        %v1073 = vpop.f32.mrf.mxu0
        %v1074 = vadd.f32 0.0, %v1073
        %v1075 = vpop.f32.mrf.mxu0
        %v1076 = vadd.f32 0.0, %v1075
        %v1077 = vpop.f32.mrf.mxu0
        %v1078 = vadd.f32 0.0, %v1077
        %1079 = vmatprep.mubr.bf16.mxu0 0
        %1080 = vmatmul.mubr.bf16.gmra.mxu0 %v1029
        %v1081 = vpop.f32.mrf.mxu0
        %v1082 = vadd.f32 0.0, %v1081
        %v1083 = vpop.f32.mrf.mxu0
        %v1084 = vadd.f32 0.0, %v1083
        %v1085 = vpop.f32.mrf.mxu0
        %v1086 = vadd.f32 0.0, %v1085
        %v1087 = vpop.f32.mrf.mxu0
        %v1088 = vadd.f32 0.0, %v1087
        %1089 = vmatprep.mubr.bf16.mxu0 0
        %1090 = vmatmul.mubr.bf16.gmra.mxu0 %v1032
        %v1091 = vpop.f32.mrf.mxu0
        %v1092 = vadd.f32 0.0, %v1091
        %v1093 = vpop.f32.mrf.mxu0
        %v1094 = vadd.f32 0.0, %v1093
        %v1095 = vpop.f32.mrf.mxu0
        %v1096 = vadd.f32 0.0, %v1095
        %v1097 = vpop.f32.mrf.mxu0
        %v1098 = vadd.f32 0.0, %v1097
        %1099 = vmatprep.mubr.bf16.mxu0 0
        %1100 = vmatmul.mubr.bf16.gmra.mxu0 %v1035
        %v1101 = vpop.f32.mrf.mxu0
        %v1102 = vadd.f32 0.0, %v1101
        %v1103 = vpop.f32.mrf.mxu0
        %v1104 = vadd.f32 0.0, %v1103
        %v1105 = vpop.f32.mrf.mxu0
        %v1106 = vadd.f32 0.0, %v1105
        %v1107 = vpop.f32.mrf.mxu0
        %v1108 = vadd.f32 0.0, %v1107
        %1109 = vdwg.mxu0
        %v1110 = vadd.f32 %v1072, %v1074
        %1111 = vadd.xlane.f32.xlu0 %v1110
        %v1112 = vpop.xlane.xlu0 %1111
        %v1113 = vadd.f32 %v1076, %v1078
        %1114 = vadd.xlane.f32.xlu0 %v1113
        %v1115 = vpop.xlane.xlu0 %1114
        %v1116 = vadd.f32 %v1082, %v1084
        %1117 = vadd.xlane.f32.xlu0 %v1116
        %v1118 = vpop.xlane.xlu0 %1117
        %v1119 = vadd.f32 %v1086, %v1088
        %1120 = vadd.xlane.f32.xlu0 %v1119
        %v1121 = vpop.xlane.xlu0 %1120
        %v1122 = vadd.f32 %v1092, %v1094
        %1123 = vadd.xlane.f32.xlu0 %v1122
        %v1124 = vpop.xlane.xlu0 %1123
        %v1125 = vadd.f32 %v1096, %v1098
        %1126 = vadd.xlane.f32.xlu0 %v1125
        %v1127 = vpop.xlane.xlu0 %1126
        %v1128 = vadd.f32 %v1102, %v1104
        %1129 = vadd.xlane.f32.xlu0 %v1128
        %v1130 = vpop.xlane.xlu0 %1129
        %v1131 = vadd.f32 %v1106, %v1108
        %1132 = vadd.xlane.f32.xlu0 %v1131
        %v1133 = vpop.xlane.xlu0 %1132
        %v1134 = vrcp.pop 256.0
        %v1135 = vmul.f32 %v1112, %v1134
        %v1136 = vmul.f32 %v1115, %v1134
        %v1137 = vmul.f32 %v1118, %v1134
        %v1138 = vmul.f32 %v1121, %v1134
        %v1139 = vmul.f32 %v1124, %v1134
        %v1140 = vmul.f32 %v1127, %v1134
        %v1141 = vmul.f32 %v1130, %v1134
        %v1142 = vmul.f32 %v1133, %v1134
        %v1143 = vsub.f32 %v1072, %v1135
        %v1144 = vsub.f32 %v1074, %v1135
        %v1145 = vsub.f32 %v1076, %v1136
        %v1146 = vsub.f32 %v1078, %v1136
        %v1147 = vsub.f32 %v1082, %v1137
        %v1148 = vsub.f32 %v1084, %v1137
        %v1149 = vsub.f32 %v1086, %v1138
        %v1150 = vsub.f32 %v1088, %v1138
        %v1151 = vsub.f32 %v1092, %v1139
        %v1152 = vsub.f32 %v1094, %v1139
        %v1153 = vsub.f32 %v1096, %v1140
        %v1154 = vsub.f32 %v1098, %v1140
        %v1155 = vsub.f32 %v1102, %v1141
        %v1156 = vsub.f32 %v1104, %v1141
        %v1157 = vsub.f32 %v1106, %v1142
        %v1158 = vsub.f32 %v1108, %v1142
        %v1159 = vmul.f32 %v1143, %v1143
        %v1160 = vmul.f32 %v1144, %v1144
        %v1161 = vmul.f32 %v1145, %v1145
        %v1162 = vmul.f32 %v1146, %v1146
        %v1163 = vmul.f32 %v1147, %v1147
        %v1164 = vmul.f32 %v1148, %v1148
        %v1165 = vmul.f32 %v1149, %v1149
        %v1166 = vmul.f32 %v1150, %v1150
        %v1167 = vmul.f32 %v1151, %v1151
        %v1168 = vmul.f32 %v1152, %v1152
        %v1169 = vmul.f32 %v1153, %v1153
        %v1170 = vmul.f32 %v1154, %v1154
        %v1171 = vmul.f32 %v1155, %v1155
        %v1172 = vmul.f32 %v1156, %v1156
        %v1173 = vmul.f32 %v1157, %v1157
        %v1174 = vmul.f32 %v1158, %v1158
        %v1175 = vadd.f32 %v1159, %v1160
        %1176 = vadd.xlane.f32.xlu0 %v1175
        %v1177 = vpop.xlane.xlu0 %1176
        %v1178 = vadd.f32 %v1161, %v1162
        %1179 = vadd.xlane.f32.xlu0 %v1178
        %v1180 = vpop.xlane.xlu0 %1179
        %v1181 = vadd.f32 %v1163, %v1164
        %1182 = vadd.xlane.f32.xlu0 %v1181
        %v1183 = vpop.xlane.xlu0 %1182
        %v1184 = vadd.f32 %v1165, %v1166
        %1185 = vadd.xlane.f32.xlu0 %v1184
        %v1186 = vpop.xlane.xlu0 %1185
        %v1187 = vadd.f32 %v1167, %v1168
        %1188 = vadd.xlane.f32.xlu0 %v1187
        %v1189 = vpop.xlane.xlu0 %1188
        %v1190 = vadd.f32 %v1169, %v1170
        %1191 = vadd.xlane.f32.xlu0 %v1190
        %v1192 = vpop.xlane.xlu0 %1191
        %v1193 = vadd.f32 %v1171, %v1172
        %1194 = vadd.xlane.f32.xlu0 %v1193
        %v1195 = vpop.xlane.xlu0 %1194
        %v1196 = vadd.f32 %v1173, %v1174
        %1197 = vadd.xlane.f32.xlu0 %v1196
        %v1198 = vpop.xlane.xlu0 %1197
        %v1199 = vmul.f32 %v1177, %v1134
        %v1200 = vmul.f32 %v1180, %v1134
        %v1201 = vmul.f32 %v1183, %v1134
        %v1202 = vmul.f32 %v1186, %v1134
        %v1203 = vmul.f32 %v1189, %v1134
        %v1204 = vmul.f32 %v1192, %v1134
        %v1205 = vmul.f32 %v1195, %v1134
        %v1206 = vmul.f32 %v1198, %v1134
        %v1207 = vadd.f32 %v1199, 1e-05
        %v1208 = vadd.f32 %v1200, 1e-05
        %v1209 = vadd.f32 %v1201, 1e-05
        %v1210 = vadd.f32 %v1202, 1e-05
        %v1211 = vadd.f32 %v1203, 1e-05
        %v1212 = vadd.f32 %v1204, 1e-05
        %v1213 = vadd.f32 %v1205, 1e-05
        %v1214 = vadd.f32 %v1206, 1e-05
        %v1215 = vrsqrt.pop %v1207
        %v1216 = vrsqrt.pop %v1208
        %v1217 = vrsqrt.pop %v1209
        %v1218 = vrsqrt.pop %v1210
        %v1219 = vrsqrt.pop %v1211
        %v1220 = vrsqrt.pop %v1212
        %v1221 = vrsqrt.pop %v1213
        %v1222 = vrsqrt.pop %v1214
        %v1223 = vmul.f32 %v1143, %v1215
        %v1224 = vmul.f32 %v1144, %v1215
        %v1225 = vmul.f32 %v1145, %v1216
        %v1226 = vmul.f32 %v1146, %v1216
        %v1227 = vmul.f32 %v1147, %v1217
        %v1228 = vmul.f32 %v1148, %v1217
        %v1229 = vmul.f32 %v1149, %v1218
        %v1230 = vmul.f32 %v1150, %v1218
        %v1231 = vmul.f32 %v1151, %v1219
        %v1232 = vmul.f32 %v1152, %v1219
        %v1233 = vmul.f32 %v1153, %v1220
        %v1234 = vmul.f32 %v1154, %v1220
        %v1235 = vmul.f32 %v1155, %v1221
        %v1236 = vmul.f32 %v1156, %v1221
        %v1237 = vmul.f32 %v1157, %v1222
        %v1238 = vmul.f32 %v1158, %v1222
        %v1239 = vld [vmem:[%s4] sm:$0x3]
        %v1241 = vlaneseq
        %v1242 = vshrl.u32 %v1241, 7
        %v1243 = vsub.s32 0, %v1242
        %v1244 = vrot.slane %v1239, %v1243
        %v1245 = vlaneseq
        %v1246 = vshrl.u32 %v1245, 7
        %v1247 = vsub.s32 1, %v1246
        %v1248 = vrot.slane %v1239, %v1247
        %v1251 = vmul.f32 %v1223, %v1244
        %v1252 = vmul.f32 %v1224, %v1248
        %v1253 = vmul.f32 %v1225, %v1244
        %v1254 = vmul.f32 %v1226, %v1248
        %v1255 = vmul.f32 %v1227, %v1244
        %v1256 = vmul.f32 %v1228, %v1248
        %v1257 = vmul.f32 %v1229, %v1244
        %v1258 = vmul.f32 %v1230, %v1248
        %v1259 = vmul.f32 %v1231, %v1244
        %v1260 = vmul.f32 %v1232, %v1248
        %v1261 = vmul.f32 %v1233, %v1244
        %v1262 = vmul.f32 %v1234, %v1248
        %v1263 = vmul.f32 %v1235, %v1244
        %v1264 = vmul.f32 %v1236, %v1248
        %v1265 = vmul.f32 %v1237, %v1244
        %v1266 = vmul.f32 %v1238, %v1248
        %v1267 = vld [vmem:[%s5] sm:$0x3]
        %v1269 = vlaneseq
        %v1270 = vshrl.u32 %v1269, 7
        %v1271 = vsub.s32 0, %v1270
        %v1272 = vrot.slane %v1267, %v1271
        %v1273 = vlaneseq
        %v1274 = vshrl.u32 %v1273, 7
        %v1275 = vsub.s32 1, %v1274
        %v1276 = vrot.slane %v1267, %v1275
        %v1279 = vadd.f32 %v1251, %v1272
        %v1280 = vadd.f32 %v1252, %v1276
        %v1281 = vadd.f32 %v1253, %v1272
        %v1282 = vadd.f32 %v1254, %v1276
        %v1283 = vadd.f32 %v1255, %v1272
        %v1284 = vadd.f32 %v1256, %v1276
        %v1285 = vadd.f32 %v1257, %v1272
        %v1286 = vadd.f32 %v1258, %v1276
        %v1287 = vadd.f32 %v1259, %v1272
        %v1288 = vadd.f32 %v1260, %v1276
        %v1289 = vadd.f32 %v1261, %v1272
        %v1290 = vadd.f32 %v1262, %v1276
        %v1291 = vadd.f32 %v1263, %v1272
        %v1292 = vadd.f32 %v1264, %v1276
        %v1293 = vadd.f32 %v1265, %v1272
        %v1294 = vadd.f32 %v1266, %v1276
        %1295 = vst [vmem:[%s379] sm:$0xff] %v1279
        %1296 = vst [vmem:[%s379 + $0x8] sm:$0xff] %v1280
        %1297 = vst [vmem:[%s379 + $0x10] sm:$0xff] %v1281
        %1298 = vst [vmem:[%s379 + $0x18] sm:$0xff] %v1282
        %1299 = vst [vmem:[%s379 + $0x20] sm:$0xff] %v1283
        %1300 = vst [vmem:[%s379 + $0x28] sm:$0xff] %v1284
        %1301 = vst [vmem:[%s379 + $0x30] sm:$0xff] %v1285
        %1302 = vst [vmem:[%s379 + $0x38] sm:$0xff] %v1286
        %1303 = vst [vmem:[%s379 + $0x40] sm:$0xff] %v1287
        %1304 = vst [vmem:[%s379 + $0x48] sm:$0xff] %v1288
        %1305 = vst [vmem:[%s379 + $0x50] sm:$0xff] %v1289
        %1306 = vst [vmem:[%s379 + $0x58] sm:$0xff] %v1290
        %1307 = vst [vmem:[%s379 + $0x60] sm:$0xff] %v1291
        %1308 = vst [vmem:[%s379 + $0x68] sm:$0xff] %v1292
        %1309 = vst [vmem:[%s379 + $0x70] sm:$0xff] %v1293
        %1310 = vst [vmem:[%s379 + $0x78] sm:$0xff] %v1294
        %s1311 = sand.u32 %s214, 1
        %s1312 = scalar_lea.sflag [#allocation4], %s1311
        %s1313 = sand.u32 %s214, 1
        %s1314 = smul.addr %s1313, 128
        %s1315 = scalar_lea.vmem [#allocation8], %s1314
        // Predicated region
        $region65: #{tpu_custom_call.1} parent=51 // pred_check
          %p1316 = pneg %p224
        $region66: #{tpu_custom_call.1} parent=51 // pred_check_branch
          %1318 = sbr.rel (%p1316) target = $region68
        $region67: #{tpu_custom_call.1} parent=51 // pred_region
          %s1319 = smul.u32 8, %s28
          %s1321 = ssub.s32 2048, 2048
          %1322 = vsyncadd %s1312, %s1321
          %s1323 = smul.addr %s1319, 2
          %s1324 = smul.addr %s1323, 128
          %s1325 = scalar_lea.hbm %s8, %s1324
          %s1326 = sshll.u32 %s1315, 4
          %s1327 = int_to_ptr.vmem [resolvable:$true] %s1326
          %1332 = dma.vmem_to_hbm [thread:$0]  %s1327, 2048, %s1325, %s1312, 256, 256, 16
        $region68: #{tpu_custom_call.1} parent=51 // pred_fallthru
          _
      $region52: #{tpu_custom_call.1} parent=5 // pred_fallthru
        _
      %p1333 = scmp.le.s32.totalorder 2, %s23
      // Predicated region
      $region69: #{tpu_custom_call.1} parent=5 // pred_check
        %p1334 = pneg %p1333
      $region70: #{tpu_custom_call.1} parent=5 // pred_check_branch
        %1336 = sbr.rel (%p1334) target = $region72
      $region71: #{tpu_custom_call.1} parent=5 // pred_region
        %s1337 = ssub.s32 %s23, 2
        // Predicated region
        $region73: #{tpu_custom_call.1} parent=71 // pred_check
          %p1338 = pneg %p230
        $region74: #{tpu_custom_call.1} parent=71 // pred_check_branch
          %1340 = sbr.rel (%p1338) target = $region76
        $region75: #{tpu_custom_call.1} parent=71 // pred_region
          %s1341 = sand.u32 %s215, 1
          %s1342 = scalar_lea.sflag [#allocation4], %s1341
          %s1343 = sand.u32 %s215, 1
          %s1344 = smul.addr %s1343, 128
          %s1345 = scalar_lea.vmem [#allocation8], %s1344
          %1346 = dma.done %s1342, 2048
        $region76: #{tpu_custom_call.1} parent=71 // pred_fallthru
          _
      $region72: #{tpu_custom_call.1} parent=5 // pred_fallthru
        _
    $region6: #{tpu_custom_call.1} parent=1 // loop_footer
      %s27 = sadd.s32 1, %s23
    $region7: #{tpu_custom_call.1} parent=1 // loop_footer_branch
      %22 = sbr.rel target = $region3
    $region8: #{tpu_custom_call.1} parent=1 // loop_exit
      _
    %1347 = vsyncpa [#allocation3], 1
    %s1348 = scalar_lea.sflag [#allocation3], 1
    %1349 = vsyncpa %s1348, 1
    %1350 = vsyncpa [#allocation6], 1
    %s1351 = scalar_lea.sflag [#allocation6], 1
    %1352 = vsyncpa %s1351, 1
    %1353 = vsyncpa [#allocation4], 1
    %s1354 = scalar_lea.sflag [#allocation4], 1
    %1355 = vsyncpa %s1354, 1

</llo_original>
